<compile_context>
chip_gen: v5e
topology: v5e:2x2
jax: 0.10.0
libtpu: 0.0.40
codegen_flags: <defaults>
</compile_context>

<pallas_src>
import functools

import jax
import jax.numpy as jnp
from jax.experimental import pallas as pl
from jax.experimental.pallas import tpu as pltpu


def _accuracy_partial_kernel(pred_ref, tgt_ref, out_ref, *, n_total):
    """One batch tile: count rows whose argmax equals the target label."""
    i = pl.program_id(0)

    preds = pred_ref[...]                 # (T, C) native dtype — no f32 upcast
    tgts = tgt_ref[...]                   # (T, 1) int32
    t, c = preds.shape

    col_ids = jax.lax.broadcasted_iota(jnp.int32, (t, c), 1)

    # Target logit per row via masked lane-max (exact in the native dtype).
    neg_inf = jnp.asarray(-jnp.inf, dtype=preds.dtype)
    tgt_val = jnp.max(jnp.where(col_ids == tgts, preds, neg_inf),
                      axis=1, keepdims=True)                      # (T, 1)

    # Column j "beats" the target under first-occurrence argmax order iff
    #   preds[j] > preds[t]  OR  (preds[j] == preds[t] AND j < t).
    # argmax == target  <=>  no column beats the target.
    beaten = (preds > tgt_val) | ((preds == tgt_val) & (col_ids < tgts))  # (T, C)

    # Offload the violation-count lane reduction to the MXU: 0/1 bf16 matvec
    # against ones, exact in the f32 accumulator (counts <= C << 2^24).
    ones_c = jnp.ones((c, 1), dtype=jnp.bfloat16)
    n_beat = jnp.dot(beaten.astype(jnp.bfloat16), ones_c,
                     preferred_element_type=jnp.float32)          # (T, 1)
    correct = (n_beat == 0.0).astype(jnp.float32)                 # (T, 1)

    if n_total % t != 0:
        last = pl.num_programs(0) - 1

        @pl.when(i == last)  # cold path: mask rows past the true batch size
        def _():
            row_ids = i * t + jax.lax.broadcasted_iota(jnp.int32, (t, 1), 0)
            masked = jnp.where(row_ids < n_total, correct, 0.0)
            out_ref[...] = jnp.sum(masked).reshape(1, 1)

        @pl.when(i != last)  # steady state: mask-free fast path
        def _():
            out_ref[...] = jnp.sum(correct).reshape(1, 1)
    else:
        out_ref[...] = jnp.sum(correct).reshape(1, 1)


def _sublane_align(itemsize: int) -> int:
    """Dtype-aware row alignment: 8 for f32, 16 for bf16, 32 for int8/fp8."""
    return max(8, 32 // max(1, itemsize))


def _choose_tile(n, c, itemsize, target_bytes=2 << 20):
    """Pick a batch-tile size giving ~2 MiB prediction blocks.

    Rows are rounded to the dtype's sublane multiple; if the total input is big
    enough to matter (> 512 KiB) we force at least two tiles so the "parallel"
    grid axis shards across both TensorCores on v7x.
    """
    align = _sublane_align(itemsize)
    total_bytes = n * c * itemsize
    rows = target_bytes // max(1, c * itemsize)
    rows = max(align, (rows // align) * align)
    if total_bytes > (512 << 10):
        half = -(-n // 2)                      # ceil(N/2)
        half = -(-half // align) * align       # round up to alignment
        rows = min(rows, half)
    if rows >= n:
        return n, 1
    num_tiles = -(-n // rows)
    return rows, num_tiles


def accuracy(predictions: jax.Array, targets: jax.Array,
             tile_n: int | None = None) -> jax.Array:
    """predictions: (N, C) float logits; targets: (N,) int labels. Returns scalar f32 in %."""
    n, c = predictions.shape
    tgts2d = targets.reshape(n, 1).astype(jnp.int32)
    itemsize = predictions.dtype.itemsize
    align = _sublane_align(itemsize)

    if tile_n is None:
        tile, num_tiles = _choose_tile(n, c, itemsize)
    else:
        if tile_n >= n:
            tile, num_tiles = n, 1
        else:
            tile = max(align, (tile_n // align) * align)   # sublane-aligned
            num_tiles = -(-n // tile)

    partials = pl.pallas_call(
        functools.partial(_accuracy_partial_kernel, n_total=n),
        out_shape=jax.ShapeDtypeStruct((num_tiles, 1), jnp.float32),
        grid=(num_tiles,),
        in_specs=[
            pl.BlockSpec((tile, c), lambda i: (i, 0)),     # native dtype, no upcast
            pl.BlockSpec((tile, 1), lambda i: (i, 0)),
        ],
        out_specs=pl.BlockSpec((1, 1), lambda i: (i, 0)),
        compiler_params=pltpu.CompilerParams(
            dimension_semantics=("parallel",),             # independent partial sums
            vmem_limit_bytes=32 * 1024 * 1024,             # blocks + temporaries; v5e/v7x safe
        ),
    )(predictions, tgts2d)

    # Tiny wrapper-side reduction; same op order as the reference (100 * sum / N).
    return jnp.sum(partials) * 100.0 / n


def _reference(predictions, targets):
    pred_cls = jnp.argmax(predictions, axis=1).astype(jnp.int32)
    return 100.0 * jnp.sum(
        (pred_cls == targets.astype(jnp.int32)).astype(jnp.float32)) / predictions.shape[0]


if __name__ == "__main__":
    key = jax.random.PRNGKey(0)
    kp, kt, kp2, kp3, kt2 = jax.random.split(key, 5)

    # Small shapes consistent with a classification metric: 72 samples, 128 classes.
    N, C = 72, 128
    predictions = jax.random.normal(kp, (N, C), dtype=jnp.float32)
    targets = jax.random.randint(kt, (N,), 0, C, dtype=jnp.int32)
    ref = _reference(predictions, targets)

    # 1) Default tiling (single tile at this size).
    acc = accuracy(predictions, targets)
    jax.block_until_ready(acc)
    assert jnp.allclose(acc, ref, atol=1e-4), (acc, ref)

    # 2) Forced small tiles -> multi-step grid with a partial last tile (masking path).
    acc_tiled = accuracy(predictions, targets, tile_n=16)
    jax.block_until_ready(acc_tiled)
    assert jnp.allclose(acc_tiled, ref, atol=1e-4), (acc_tiled, ref)

    # 3) bf16 logits go through the kernel in native dtype (no upcast anywhere).
    preds_bf16 = jax.random.normal(kp2, (N, C), dtype=jnp.bfloat16)
    acc_bf16 = accuracy(preds_bf16, targets, tile_n=16)
    jax.block_until_ready(acc_bf16)
    ref_bf16 = _reference(preds_bf16.astype(jnp.float32), targets)
    assert jnp.allclose(acc_bf16, ref_bf16, atol=1e-4), (acc_bf16, ref_bf16)

    # 4) Heavily tied logits exercise the first-occurrence tie-break path.
    preds_ties = jax.random.randint(kp3, (N, C), 0, 3).astype(jnp.float32)
    acc_ties = accuracy(preds_ties, targets, tile_n=16)
    jax.block_until_ready(acc_ties)
    ref_ties = _reference(preds_ties, targets)
    assert jnp.allclose(acc_ties, ref_ties, atol=1e-4), (acc_ties, ref_ties)

    # 5) Larger input exercises the default chooser's forced >=2-tile (dual-TC) path.
    N2, C2 = 1024, 256
    preds_big = jax.random.normal(kp2, (N2, C2), dtype=jnp.float32)
    tgts_big = jax.random.randint(kt2, (N2,), 0, C2, dtype=jnp.int32)
    acc_big = accuracy(preds_big, tgts_big)
    jax.block_until_ready(acc_big)
    ref_big = _reference(preds_big, tgts_big)
    assert jnp.allclose(acc_big, ref_big, atol=1e-4), (acc_big, ref_big)

    print("KERNEL_OK")
</pallas_src>

<mosaic_0001>
module attributes {stable_mosaic.version = 11 : i64} {
  func.func @_accuracy_partial_kernel(%arg0: i32, %arg1: memref<72x128xf32, #tpu.memory_space<vmem>>, %arg2: memref<72x1xi32, #tpu.memory_space<vmem>>, %arg3: memref<1x1xf32, #tpu.memory_space<vmem>>) attributes {dimension_semantics = [#tpu.dimension_semantics<parallel>], iteration_bounds = array<i64: 1>, scalar_prefetch = 0 : i64, scratch_operands = 0 : i64, tpu.core_type = #tpu.core_type<tc>, window_params = [{transform_indices = @transform_0, window_bounds = array<i64: 72, 128>}, {transform_indices = @transform_1, window_bounds = array<i64: 72, 1>}, {transform_indices = @transform_2, window_bounds = array<i64: 1, 1>}]} {
    %c0 = arith.constant 0 : index
    %c0_0 = arith.constant 0 : index
    %0 = vector.load %arg1[%c0, %c0_0] : memref<72x128xf32, #tpu.memory_space<vmem>>, vector<72x128xf32>
    %c0_1 = arith.constant 0 : index
    %c0_2 = arith.constant 0 : index
    %1 = vector.load %arg2[%c0_1, %c0_2] : memref<72x1xi32, #tpu.memory_space<vmem>>, vector<72x1xi32>
    %2 = tpu.iota {dimensions = array<i32: 1>} : vector<72x128xi32>
    %3 = vector.broadcast %1 : vector<72x1xi32> to vector<72x128xi32>
    %4 = arith.cmpi eq, %2, %3 : vector<72x128xi32>
    %cst = arith.constant 0xFF800000 : f32
    %5 = vector.broadcast %cst : f32 to vector<72x128xf32>
    %6 = arith.select %4, %0, %5 : vector<72x128xi1>, vector<72x128xf32>
    %cst_3 = arith.constant dense<0xFF800000> : vector<72xf32>
    %7 = vector.multi_reduction <maximumf>, %6, %cst_3 [1] : vector<72x128xf32> to vector<72xf32>
    %8 = vector.shape_cast %7 : vector<72xf32> to vector<72x1xf32>
    %9 = vector.broadcast %8 : vector<72x1xf32> to vector<72x128xf32>
    %10 = arith.cmpf ogt, %0, %9 : vector<72x128xf32>
    %11 = vector.broadcast %8 : vector<72x1xf32> to vector<72x128xf32>
    %12 = arith.cmpf oeq, %0, %11 : vector<72x128xf32>
    %13 = vector.broadcast %1 : vector<72x1xi32> to vector<72x128xi32>
    %14 = arith.cmpi slt, %2, %13 : vector<72x128xi32>
    %15 = arith.andi %12, %14 : vector<72x128xi1>
    %16 = arith.ori %10, %15 : vector<72x128xi1>
    %cst_4 = arith.constant 1.000000e+00 : bf16
    %17 = vector.broadcast %cst_4 : bf16 to vector<128x1xbf16>
    %18 = arith.extui %16 : vector<72x128xi1> to vector<72x128xi32>
    %19 = arith.sitofp %18 : vector<72x128xi32> to vector<72x128xf32>
    %20 = arith.truncf %19 : vector<72x128xf32> to vector<72x128xbf16>
    %cst_5 = arith.constant dense<0.000000e+00> : vector<72x1xf32>
    %21 = tpu.matmul %20, %17, %cst_5 {dimension_numbers = #tpu.dot_dimension_numbers<[1], [0], [0], [1], [0, 0, 1, 1], [], []>} : vector<72x128xbf16>, vector<128x1xbf16>, vector<72x1xf32> -> vector<72x1xf32>
    %cst_6 = arith.constant 0.000000e+00 : f32
    %22 = vector.broadcast %cst_6 : f32 to vector<72x1xf32>
    %23 = arith.cmpf oeq, %21, %22 : vector<72x1xf32>
    %24 = arith.extui %23 : vector<72x1xi1> to vector<72x1xi32>
    %25 = arith.sitofp %24 : vector<72x1xi32> to vector<72x1xf32>
    %26 = vector.shape_cast %25 : vector<72x1xf32> to vector<1x72x1xf32>
    %cst_7 = arith.constant dense<0.000000e+00> : vector<1xf32>
    %27 = vector.multi_reduction <add>, %26, %cst_7 [1, 2] : vector<1x72x1xf32> to vector<1xf32>
    %28 = vector.shape_cast %27 : vector<1xf32> to vector<1x1x1xf32>
    %29 = vector.extract %28[0, 0, 0] : f32 from vector<1x1x1xf32>
    %30 = vector.broadcast %29 : f32 to vector<1x1xf32>
    %c0_8 = arith.constant 0 : index
    %c0_9 = arith.constant 0 : index
    %31 = vector.load %arg3[%c0_8, %c0_9] : memref<1x1xf32, #tpu.memory_space<vmem>>, vector<1x1xf32>
    tpu.vector_store %arg3[%c0_8, %c0_9], %30 {strides = array<i32>} : memref<1x1xf32, #tpu.memory_space<vmem>>, vector<1x1xf32>,
    return
  }
  func.func @transform_0(%arg0: i32) -> (i32, i32) {
    %c0_i32 = arith.constant 0 : i32
    %c0_i32_0 = arith.constant 0 : i32
    return %arg0, %c0_i32 : i32, i32
  }
  func.func @transform_1(%arg0: i32) -> (i32, i32) {
    %c0_i32 = arith.constant 0 : i32
    %c0_i32_0 = arith.constant 0 : i32
    return %arg0, %c0_i32 : i32, i32
  }
  func.func @transform_2(%arg0: i32) -> (i32, i32) {
    %c0_i32 = arith.constant 0 : i32
    %c0_i32_0 = arith.constant 0 : i32
    return %arg0, %c0_i32 : i32, i32
  }
}

</mosaic_0001>

<llo_original>
// kernel: tpu_custom_call.1
$region0: #{tpu_custom_call.1}
  #allocation0 [shape = 'u32[]', space=smem, size = 0x4, offset = 0x4, fixed_abs, tag = 'smem constant byte address 0x4 - core index']
  #allocation1 [shape = 'u32[72,128]{1,0:T(1,128)}', space=vmem, size = 0x9000, scoped, tag = 'internal scratch']
  %s0 = inlined_call_operand.vmem [shape: f32[72,128], index: 0, kind: input, shape index: {}]
  %s1 = inlined_call_operand.vmem [shape: s32[72,1], index: 1, kind: input, shape index: {}]
  %s2 = inlined_call_operand.hbm [shape: f32[1,1], index: 2, kind: output, shape index: {}]
  %s3 = sld [smem:[#allocation0]]
  $region18: #{tpu_custom_call.1} parent=0
    _
  %s5 = ssub.s32 1, %s3
  %s6 = scalar_select 0, %s5, %s3
  $region1: #{tpu_custom_call.1} parent=0
    #allocation2 [shape = 'u8[512]{0}', space=vmem, size = 0x400, scoped, tag = 'output window, operand 0, single buffered']
    #allocation3 [shape = 's32[1]{0}', space=sflag, size = 0x4, scoped, tag = 'scoped memory for tpu_custom_call.1']
    %7 = vsyncpa [#allocation3], 0
    // Predicated region
    $region2: #{tpu_custom_call.1} parent=1 // pred_check
      _
    $region3: #{tpu_custom_call.1} parent=1 // pred_check_branch
      %9 = sbr.rel (0) target = $region5
    $region4: #{tpu_custom_call.1} parent=1 // pred_region
      _
    $region5: #{tpu_custom_call.1} parent=1 // pred_fallthru
      _
    // Predicated region
    $region6: #{tpu_custom_call.1} parent=1 // pred_check
      _
    $region7: #{tpu_custom_call.1} parent=1 // pred_check_branch
      %11 = sbr.rel (0) target = $region9
    $region8: #{tpu_custom_call.1} parent=1 // pred_region
      _
    $region9: #{tpu_custom_call.1} parent=1 // pred_fallthru
      _
    %v13 = vld [vmem:[%s0] sm:$0xff]
    %v14 = vld [vmem:[%s0 + $0x8] sm:$0xff]
    %v15 = vld [vmem:[%s0 + $0x10] sm:$0xff]
    %v16 = vld [vmem:[%s0 + $0x18] sm:$0xff]
    %v17 = vld [vmem:[%s0 + $0x20] sm:$0xff]
    %v18 = vld [vmem:[%s0 + $0x28] sm:$0xff]
    %v19 = vld [vmem:[%s0 + $0x30] sm:$0xff]
    %v20 = vld [vmem:[%s0 + $0x38] sm:$0xff]
    %v21 = vld [vmem:[%s0 + $0x40] sm:$0xff]
    %v22 = vld [vmem:[%s1] sm:$0xff]
    %v23 = vld [vmem:[%s1 + $0x8] sm:$0xff]
    %v24 = vld [vmem:[%s1 + $0x10] sm:$0xff]
    %v25 = vld [vmem:[%s1 + $0x18] sm:$0xff]
    %v26 = vld [vmem:[%s1 + $0x20] sm:$0xff]
    %v27 = vld [vmem:[%s1 + $0x28] sm:$0xff]
    %v28 = vld [vmem:[%s1 + $0x30] sm:$0xff]
    %v29 = vld [vmem:[%s1 + $0x38] sm:$0xff]
    %v30 = vld [vmem:[%s1 + $0x40] sm:$0xff]
    %v31 = vlaneseq
    %v32 = vand.u32 %v31, 127
    %33 = vset.pattern.permute.xlu0 0
    %34 = vperm.xlu0 %33, %v22
    %v35 = vpop.permute.xlu0 %34
    %36 = vset.pattern.permute.xlu0 0
    %37 = vperm.xlu0 %36, %v23
    %v38 = vpop.permute.xlu0 %37
    %39 = vset.pattern.permute.xlu0 0
    %40 = vperm.xlu0 %39, %v24
    %v41 = vpop.permute.xlu0 %40
    %42 = vset.pattern.permute.xlu0 0
    %43 = vperm.xlu0 %42, %v25
    %v44 = vpop.permute.xlu0 %43
    %45 = vset.pattern.permute.xlu0 0
    %46 = vperm.xlu0 %45, %v26
    %v47 = vpop.permute.xlu0 %46
    %48 = vset.pattern.permute.xlu0 0
    %49 = vperm.xlu0 %48, %v27
    %v50 = vpop.permute.xlu0 %49
    %51 = vset.pattern.permute.xlu0 0
    %52 = vperm.xlu0 %51, %v28
    %v53 = vpop.permute.xlu0 %52
    %54 = vset.pattern.permute.xlu0 0
    %55 = vperm.xlu0 %54, %v29
    %v56 = vpop.permute.xlu0 %55
    %57 = vset.pattern.permute.xlu0 0
    %58 = vperm.xlu0 %57, %v30
    %v59 = vpop.permute.xlu0 %58
    %vm60 = vcmp.eq.s32.totalorder %v32, %v35
    %vm61 = vcmp.eq.s32.totalorder %v32, %v38
    %vm62 = vcmp.eq.s32.totalorder %v32, %v41
    %vm63 = vcmp.eq.s32.totalorder %v32, %v44
    %vm64 = vcmp.eq.s32.totalorder %v32, %v47
    %vm65 = vcmp.eq.s32.totalorder %v32, %v50
    %vm66 = vcmp.eq.s32.totalorder %v32, %v53
    %vm67 = vcmp.eq.s32.totalorder %v32, %v56
    %vm68 = vcmp.eq.s32.totalorder %v32, %v59
    %v69 = vsel %vm60, %v13, -inf
    %v70 = vsel %vm61, %v14, -inf
    %v71 = vsel %vm62, %v15, -inf
    %v72 = vsel %vm63, %v16, -inf
    %v73 = vsel %vm64, %v17, -inf
    %v74 = vsel %vm65, %v18, -inf
    %v75 = vsel %vm66, %v19, -inf
    %v76 = vsel %vm67, %v20, -inf
    %v77 = vsel %vm68, %v21, -inf
    %78 = vmax.xlane.f32.xlu0 %v69
    %v79 = vpop.xlane.xlu0 %78
    %80 = vmax.xlane.f32.xlu0 %v70
    %v81 = vpop.xlane.xlu0 %80
    %82 = vmax.xlane.f32.xlu0 %v71
    %v83 = vpop.xlane.xlu0 %82
    %84 = vmax.xlane.f32.xlu0 %v72
    %v85 = vpop.xlane.xlu0 %84
    %86 = vmax.xlane.f32.xlu0 %v73
    %v87 = vpop.xlane.xlu0 %86
    %88 = vmax.xlane.f32.xlu0 %v74
    %v89 = vpop.xlane.xlu0 %88
    %90 = vmax.xlane.f32.xlu0 %v75
    %v91 = vpop.xlane.xlu0 %90
    %92 = vmax.xlane.f32.xlu0 %v76
    %v93 = vpop.xlane.xlu0 %92
    %94 = vmax.xlane.f32.xlu0 %v77
    %v95 = vpop.xlane.xlu0 %94
    %vm96 = vcmp.gt.f32.partialorder %v13, %v79
    %vm97 = vcmp.gt.f32.partialorder %v14, %v81
    %vm98 = vcmp.gt.f32.partialorder %v15, %v83
    %vm99 = vcmp.gt.f32.partialorder %v16, %v85
    %vm100 = vcmp.gt.f32.partialorder %v17, %v87
    %vm101 = vcmp.gt.f32.partialorder %v18, %v89
    %vm102 = vcmp.gt.f32.partialorder %v19, %v91
    %vm103 = vcmp.gt.f32.partialorder %v20, %v93
    %vm104 = vcmp.gt.f32.partialorder %v21, %v95
    %vm105 = vcmp.eq.f32.partialorder %v13, %v79
    %vm106 = vcmp.eq.f32.partialorder %v14, %v81
    %vm107 = vcmp.eq.f32.partialorder %v15, %v83
    %vm108 = vcmp.eq.f32.partialorder %v16, %v85
    %vm109 = vcmp.eq.f32.partialorder %v17, %v87
    %vm110 = vcmp.eq.f32.partialorder %v18, %v89
    %vm111 = vcmp.eq.f32.partialorder %v19, %v91
    %vm112 = vcmp.eq.f32.partialorder %v20, %v93
    %vm113 = vcmp.eq.f32.partialorder %v21, %v95
    %vm114 = vcmp.lt.s32.totalorder %v32, %v35
    %vm115 = vcmp.lt.s32.totalorder %v32, %v38
    %vm116 = vcmp.lt.s32.totalorder %v32, %v41
    %vm117 = vcmp.lt.s32.totalorder %v32, %v44
    %vm118 = vcmp.lt.s32.totalorder %v32, %v47
    %vm119 = vcmp.lt.s32.totalorder %v32, %v50
    %vm120 = vcmp.lt.s32.totalorder %v32, %v53
    %vm121 = vcmp.lt.s32.totalorder %v32, %v56
    %vm122 = vcmp.lt.s32.totalorder %v32, %v59
    %vm123 = vmand %vm105, %vm114
    %vm124 = vmand %vm106, %vm115
    %vm125 = vmand %vm107, %vm116
    %vm126 = vmand %vm108, %vm117
    %vm127 = vmand %vm109, %vm118
    %vm128 = vmand %vm110, %vm119
    %vm129 = vmand %vm111, %vm120
    %vm130 = vmand %vm112, %vm121
    %vm131 = vmand %vm113, %vm122
    %vm132 = vmor %vm96, %vm123
    %vm133 = vmor %vm97, %vm124
    %vm134 = vmor %vm98, %vm125
    %vm135 = vmor %vm99, %vm126
    %vm136 = vmor %vm100, %vm127
    %vm137 = vmor %vm101, %vm128
    %vm138 = vmor %vm102, %vm129
    %vm139 = vmor %vm103, %vm130
    %vm140 = vmor %vm104, %vm131
    %v141 = vsel %vm132, 1, 0
    %v142 = vsel %vm133, 1, 0
    %v143 = vsel %vm134, 1, 0
    %v144 = vsel %vm135, 1, 0
    %v145 = vsel %vm136, 1, 0
    %v146 = vsel %vm137, 1, 0
    %v147 = vsel %vm138, 1, 0
    %v148 = vsel %vm139, 1, 0
    %v149 = vsel %vm140, 1, 0
    %v150 = vcvt.s32.f32 %v141
    %v151 = vcvt.s32.f32 %v142
    %v152 = vcvt.s32.f32 %v143
    %v153 = vcvt.s32.f32 %v144
    %v154 = vcvt.s32.f32 %v145
    %v155 = vcvt.s32.f32 %v146
    %v156 = vcvt.s32.f32 %v147
    %v157 = vcvt.s32.f32 %v148
    %v158 = vcvt.s32.f32 %v149
    %v159 = vpack.c.bf16 %v151, %v150
    %v160 = vpack.c.bf16 %v153, %v152
    %v161 = vpack.c.bf16 %v155, %v154
    %v162 = vpack.c.bf16 %v157, %v156
    %v163 = vpack.c.bf16 %v158, %v158
    %164 = vmatpush.bf16.msra.mxu0 1065369472
    %165 = vmatpush.bf16.msra.mxu0 1065369472
    %166 = vmatpush.bf16.msra.mxu0 1065369472
    %167 = vmatpush.bf16.msra.mxu0 1065369472
    %168 = vmatpush.bf16.msra.mxu0 1065369472
    %169 = vmatpush.bf16.msra.mxu0 1065369472
    %170 = vmatpush.bf16.msra.mxu0 1065369472
    %171 = vmatpush.bf16.msra.mxu0 1065369472
    %172 = vmatmul.bf16.gmra.mxu0 %v159
    %v173 = vpop.f32.mrf.mxu0
    %v174 = vadd.f32 0.0, %v173
    %v175 = vpop.f32.mrf.mxu0
    %v176 = vadd.f32 0.0, %v175
    %177 = vmatmul.bf16.gmra.mxu0 %v160
    %v178 = vpop.f32.mrf.mxu0
    %v179 = vadd.f32 0.0, %v178
    %v180 = vpop.f32.mrf.mxu0
    %v181 = vadd.f32 0.0, %v180
    %182 = vmatmul.bf16.gmra.mxu0 %v161
    %v183 = vpop.f32.mrf.mxu0
    %v184 = vadd.f32 0.0, %v183
    %v185 = vpop.f32.mrf.mxu0
    %v186 = vadd.f32 0.0, %v185
    %187 = vmatmul.bf16.gmra.mxu0 %v162
    %v188 = vpop.f32.mrf.mxu0
    %v189 = vadd.f32 0.0, %v188
    %v190 = vpop.f32.mrf.mxu0
    %v191 = vadd.f32 0.0, %v190
    %192 = vmatmul.bf16.gmra.mxu0 %v163
    %v193 = vpop.f32.mrf.mxu0
    %v194 = vadd.f32 0.0, %v193
    %v195 = vpop.f32.mrf.mxu0
    %196 = vdwg.mxu0
    %vm197 = vcmp.eq.f32.partialorder %v174, 0.0
    %vm198 = vcmp.eq.f32.partialorder %v176, 0.0
    %vm199 = vcmp.eq.f32.partialorder %v179, 0.0
    %vm200 = vcmp.eq.f32.partialorder %v181, 0.0
    %vm201 = vcmp.eq.f32.partialorder %v184, 0.0
    %vm202 = vcmp.eq.f32.partialorder %v186, 0.0
    %vm203 = vcmp.eq.f32.partialorder %v189, 0.0
    %vm204 = vcmp.eq.f32.partialorder %v191, 0.0
    %vm205 = vcmp.eq.f32.partialorder %v194, 0.0
    %v206 = vsel %vm197, 1, 0
    %v207 = vsel %vm198, 1, 0
    %v208 = vsel %vm199, 1, 0
    %v209 = vsel %vm200, 1, 0
    %v210 = vsel %vm201, 1, 0
    %v211 = vsel %vm202, 1, 0
    %v212 = vsel %vm203, 1, 0
    %v213 = vsel %vm204, 1, 0
    %v214 = vsel %vm205, 1, 0
    %v215 = vcvt.s32.f32 %v206
    %v216 = vcvt.s32.f32 %v207
    %v217 = vcvt.s32.f32 %v208
    %v218 = vcvt.s32.f32 %v209
    %v219 = vcvt.s32.f32 %v210
    %v220 = vcvt.s32.f32 %v211
    %v221 = vcvt.s32.f32 %v212
    %v222 = vcvt.s32.f32 %v213
    %v223 = vcvt.s32.f32 %v214
    %vm224 = vcmask 7168
    %v225 = vsel %vm224, %v215, 0.0
    %v226 = vsel %vm224, %v216, 0.0
    %v227 = vadd.f32 %v225, %v226
    %v228 = vsel %vm224, %v217, 0.0
    %v229 = vadd.f32 %v227, %v228
    %v230 = vsel %vm224, %v218, 0.0
    %v231 = vadd.f32 %v229, %v230
    %v232 = vsel %vm224, %v219, 0.0
    %v233 = vadd.f32 %v231, %v232
    %v234 = vsel %vm224, %v220, 0.0
    %v235 = vadd.f32 %v233, %v234
    %v236 = vsel %vm224, %v221, 0.0
    %v237 = vadd.f32 %v235, %v236
    %v238 = vsel %vm224, %v222, 0.0
    %v239 = vadd.f32 %v237, %v238
    %v240 = vsel %vm224, %v223, 0.0
    %v241 = vadd.f32 %v239, %v240
    %242 = vadd.xlane.f32.xlu0 %v241
    %v243 = vpop.xlane.xlu0 %242
    %v244 = vrot.slane %v243, 4
    %v245 = vadd.f32 %v243, %v244
    %v246 = vrot.slane %v245, 2
    %v247 = vadd.f32 %v245, %v246
    %v248 = vrot.slane %v247, 1
    %v249 = vadd.f32 %v247, %v248
    %s250 = vtos %v249
    %v251 = vstv %s250
    %vm252 = vcmask 0
    %253 = vst.msk [vmem:[#allocation2] sm:$0x1] %vm252, %v251
    // Predicated region
    $region10: #{tpu_custom_call.1} parent=1 // pred_check
      _
    $region11: #{tpu_custom_call.1} parent=1 // pred_check_branch
      %255 = sbr.rel (0) target = $region13
    $region12: #{tpu_custom_call.1} parent=1 // pred_region
      %257 = vsyncadd [#allocation3], 0
      %s259 = sshll.u32 [#allocation2], 4
      %s260 = int_to_ptr.vmem [resolvable:$true] %s259
      %s261 = sshll.u32 %s2, 4
      %s262 = int_to_ptr.hbm [resolvable:$true] %s261
      %264 = dma.vmem_to_hbm [thread:$0]  %s260, 16, %s262, [#allocation3]
    $region13: #{tpu_custom_call.1} parent=1 // pred_fallthru
      _
    // Predicated region
    $region14: #{tpu_custom_call.1} parent=1 // pred_check
      _
    $region15: #{tpu_custom_call.1} parent=1 // pred_check_branch
      %266 = sbr.rel (0) target = $region17
    $region16: #{tpu_custom_call.1} parent=1 // pred_region
      %268 = dma.done [#allocation3], 16
    $region17: #{tpu_custom_call.1} parent=1 // pred_fallthru
      _
    %269 = vsyncpa [#allocation3], 1

</llo_original>
